<compile_context>
chip_gen: v5e
topology: v5e:2x2
jax: 0.10.0
libtpu: 0.0.40
codegen_flags: <defaults>
</compile_context>

<pallas_src>
import inspect
import functools

import jax
import jax.numpy as jnp
from jax.experimental import pallas as pl
from jax.experimental.pallas import tpu as pltpu


# -----------------------------------------------------------------------------
# Pallas kernel: fused 2-layer MLP + per-channel activation (lane-dense layout)
#   x   : (in_dim, T)   points on lanes
#   h   = relu(W1^T x + b1)              (H, T)
#   o   = W2^T h + b2                    (4, T)
#   rgb = sigmoid(o[0:3, :]),  density = relu(o[3:4, :])
# -----------------------------------------------------------------------------
def nef_mlp_kernel(x_ref, w1t_ref, b1_ref, w2t_ref, b2_ref, rgb_ref, den_ref):
    x = x_ref[...].astype(jnp.float32)          # (in_dim, T)
    w1t = w1t_ref[...]                          # (H, in_dim)
    in_dim = x.shape[0]

    # Layer 1 as in_dim (=3) broadcast FMAs on the VPU; skips a K=3 MXU matmul.
    h = b1_ref[...]                             # (H, 1) -> broadcasts to (H, T)
    for k in range(in_dim):                     # static unroll
        h = h + w1t[:, k:k + 1] * x[k:k + 1, :]
    h = jnp.maximum(h, 0.0)                     # (H, T)

    # Layer 2 on the MXU with f32 accumulation.
    o = jnp.dot(w2t_ref[...], h, preferred_element_type=jnp.float32) + b2_ref[...]

    # Channel activations on static sublane slices (no iota/where, no wasted exp).
    rgb_ref[...] = jax.nn.sigmoid(o[0:3, :])    # (3, T)
    den_ref[...] = jnp.maximum(o[3:4, :], 0.0)  # (1, T)


@functools.partial(jax.jit, static_argnames=("tile_n", "input_dtype"))
def nef_mlp_pallas(coords, w1, b1, w2, b2, *, tile_n=512, input_dtype=jnp.bfloat16):
    """coords: (N, in_dim) f32.  Returns (rgb (3, N), density (1, N)) in f32."""
    n, in_dim = coords.shape
    hidden = w1.shape[1]
    out_dim = w2.shape[1]
    assert out_dim == 4, "expects 3 rgb channels + 1 density channel"

    # Ragged N: round up with cdiv and zero-pad (no n % tile_n assert).
    n_pad = tile_n * pl.cdiv(n, tile_n)

    # Lane-dense layout: transpose (+ optional bf16 cast) fuses into one XLA op
    # under jit.  Kernel sees coords as (in_dim, n_pad) with N on lanes.
    x_t = coords.T.astype(input_dtype)
    if n_pad != n:
        x_t = jnp.pad(x_t, ((0, 0), (0, n_pad - n)))
    w1_t = w1.T                       # (H, in_dim)
    b1_c = b1.reshape(hidden, 1)      # (H, 1)
    w2_t = w2.T                       # (4, H)
    b2_c = b2.reshape(out_dim, 1)     # (4, 1)

    grid = (n_pad // tile_n,)
    rgb_t, den_t = pl.pallas_call(
        nef_mlp_kernel,
        out_shape=(
            jax.ShapeDtypeStruct((3, n_pad), jnp.float32),
            jax.ShapeDtypeStruct((1, n_pad), jnp.float32),
        ),
        grid=grid,
        in_specs=[
            pl.BlockSpec((in_dim, tile_n), lambda i: (0, i)),
            pl.BlockSpec((hidden, in_dim), lambda i: (0, 0)),
            pl.BlockSpec((hidden, 1), lambda i: (0, 0)),
            pl.BlockSpec((out_dim, hidden), lambda i: (0, 0)),
            pl.BlockSpec((out_dim, 1), lambda i: (0, 0)),
        ],
        out_specs=(
            pl.BlockSpec((3, tile_n), lambda i: (0, i)),
            pl.BlockSpec((1, tile_n), lambda i: (0, i)),
        ),
        compiler_params=pltpu.CompilerParams(
            # parallel grid axis shards work across the 2 TensorCores on v7x
            dimension_semantics=("parallel",),
        ),
    )(x_t, w1_t, b1_c, w2_t, b2_c)
    return rgb_t[:, :n], den_t[:, :n]


# -----------------------------------------------------------------------------
# BaseNeuralField: forward-function registry + channel dispatch (pure Python;
# the base class itself has no tensor compute).
# TODO(synk): torch's `device` property / nn.Module parameter registration has
# no Pallas equivalent; parameters are plain jnp arrays held on the object.
# -----------------------------------------------------------------------------
class BaseNeuralField:
    def __init__(self):
        self._forward_functions = {}
        self.register_forward_functions()
        self.supported_channels = set(
            channel
            for channels in self._forward_functions.values()
            for channel in channels
        )

    def _register_forward_function(self, fn, channels):
        if isinstance(channels, str):
            channels = [channels]
        self._forward_functions[fn] = set(channels)

    def register_forward_functions(self):
        raise NotImplementedError

    def get_supported_channels(self):
        return self.supported_channels

    def get_forward_function(self, channel):
        if channel not in self.get_supported_channels():
            raise Exception(
                f"Channel {channel} is not supported in {self.__class__.__name__}"
            )
        for fn in self._forward_functions:
            if channel in self._forward_functions[fn]:
                return lambda *args, **kwargs: fn(*args, **kwargs)[channel]

    def forward(self, channels=None, **kwargs):
        if not (isinstance(channels, (str, list, set)) or channels is None):
            raise Exception(f"Channels type invalid, got {type(channels)}.")
        if channels is None:
            requested_channels = self.get_supported_channels()
        elif isinstance(channels, str):
            requested_channels = set([channels])
        else:
            requested_channels = set(channels)
        unsupported = requested_channels - self.get_supported_channels()
        if unsupported:
            raise Exception(
                f"Channels {unsupported} are not supported in {self.__class__.__name__}"
            )
        return_dict = {}
        for fn in self._forward_functions:
            output_channels = self._forward_functions[fn]
            supported = output_channels & requested_channels
            if len(supported) != 0:
                argspec = inspect.getfullargspec(fn)
                if argspec.defaults is None:
                    required_args = argspec.args[1:]
                    optional_args = []
                else:
                    required_args = argspec.args[: -len(argspec.defaults)][1:]
                    optional_args = argspec.args[-len(argspec.defaults):]
                input_args = {}
                for _arg in required_args:
                    if _arg not in kwargs:
                        raise Exception(
                            f"Argument {_arg} not found as input to "
                            f"{self.__class__.__name__}.{fn.__name__}()"
                        )
                    input_args[_arg] = kwargs[_arg]
                for _arg in optional_args:
                    if _arg in kwargs:
                        input_args[_arg] = kwargs[_arg]
                output = fn(**input_args)
                for channel in supported:
                    return_dict[channel] = output[channel]
        if isinstance(channels, str):
            return return_dict.get(channels, None)
        elif isinstance(channels, list):
            return [return_dict[channel] for channel in channels]
        else:
            return return_dict

    # make the object callable like nn.Module
    __call__ = forward


# -----------------------------------------------------------------------------
# Concrete neural field: registers an rgba() forward function whose hot path is
# the Pallas fused-MLP kernel above.
# -----------------------------------------------------------------------------
class SimpleNeuralField(BaseNeuralField):
    IN_DIM = 3
    HIDDEN = 32
    OUT_DIM = 4  # 3 rgb + 1 density

    def __init__(self, key, *, tile_n=512, input_dtype=jnp.bfloat16):
        self.tile_n = tile_n
        self.input_dtype = input_dtype
        # deterministic parameter init (synthetic; no checkpoint loading)
        k1, k2, k3, k4 = jax.random.split(key, 4)
        self.w1 = (jax.random.normal(k1, (self.IN_DIM, self.HIDDEN), jnp.float32)
                   * (1.0 / jnp.sqrt(self.IN_DIM)))
        self.b1 = jax.random.normal(k2, (1, self.HIDDEN), jnp.float32) * 0.01
        self.w2 = (jax.random.normal(k3, (self.HIDDEN, self.OUT_DIM), jnp.float32)
                   * (1.0 / jnp.sqrt(self.HIDDEN)))
        self.b2 = jax.random.normal(k4, (1, self.OUT_DIM), jnp.float32) * 0.01
        super().__init__()

    def register_forward_functions(self):
        self._register_forward_function(self.rgba, ["rgb", "density"])

    def rgba(self, coords):
        """coords: (N, 3) f32 -> {"rgb": (N, 3), "density": (N, 1)}."""
        rgb_t, den_t = nef_mlp_pallas(
            coords, self.w1, self.b1, self.w2, self.b2,
            tile_n=self.tile_n, input_dtype=self.input_dtype)
        # back to channels-last to match the torch module's (N, 3)/(N, 1) shapes
        return {"rgb": rgb_t.T, "density": den_t.T}


def reference_rgba(coords, w1, b1, w2, b2, input_dtype):
    """Pure-JAX reference (same bf16 input cast, true-f32 matmuls)."""
    x = coords.astype(input_dtype).astype(jnp.float32)
    h = jnp.maximum(jnp.dot(x, w1, precision=jax.lax.Precision.HIGHEST) + b1, 0.0)
    o = jnp.dot(h, w2, precision=jax.lax.Precision.HIGHEST) + b2
    return jax.nn.sigmoid(o[:, :3]), jnp.maximum(o[:, 3:4], 0.0)


if __name__ == "__main__":
    key = jax.random.PRNGKey(0)
    k_params, k_coords = jax.random.split(key)

    nef = SimpleNeuralField(k_params, tile_n=512)

    # N deliberately NOT a multiple of tile_n: exercises the cdiv + padding path.
    N = 1000
    coords = jax.random.uniform(k_coords, (N, 3), jnp.float32, minval=-1.0, maxval=1.0)

    # dict-style query (channels=None -> all supported channels)
    out_dict = nef(channels=None, coords=coords)
    # list-style query
    rgb, density = nef(channels=["rgb", "density"], coords=coords)
    # string-style query
    rgb_only = nef(channels="rgb", coords=coords)

    jax.block_until_ready(out_dict["rgb"])
    jax.block_until_ready(out_dict["density"])
    jax.block_until_ready(rgb)
    jax.block_until_ready(density)
    jax.block_until_ready(rgb_only)

    assert out_dict["rgb"].shape == (N, 3)
    assert out_dict["density"].shape == (N, 1)
    assert bool(jnp.allclose(rgb, rgb_only))

    # correctness vs. pure-JAX reference
    ref_rgb, ref_den = reference_rgba(
        coords, nef.w1, nef.b1, nef.w2, nef.b2, nef.input_dtype)
    assert bool(jnp.allclose(rgb, ref_rgb, atol=1e-3, rtol=1e-3))
    assert bool(jnp.allclose(density, ref_den, atol=1e-3, rtol=1e-3))

    print("KERNEL_OK")
</pallas_src>

<mosaic_0001>
module attributes {stable_mosaic.version = 11 : i64} {
  func.func @nef_mlp_kernel(%arg0: i32, %arg1: memref<3x512xbf16, #tpu.memory_space<vmem>>, %arg2: memref<32x3xf32, #tpu.memory_space<vmem>>, %arg3: memref<32x1xf32, #tpu.memory_space<vmem>>, %arg4: memref<4x32xf32, #tpu.memory_space<vmem>>, %arg5: memref<4x1xf32, #tpu.memory_space<vmem>>, %arg6: memref<3x512xf32, #tpu.memory_space<vmem>>, %arg7: memref<1x512xf32, #tpu.memory_space<vmem>>) attributes {dimension_semantics = [#tpu.dimension_semantics<parallel>], iteration_bounds = array<i64: 2>, scalar_prefetch = 0 : i64, scratch_operands = 0 : i64, tpu.core_type = #tpu.core_type<tc>, window_params = [{transform_indices = @transform_0, window_bounds = array<i64: 3, 512>}, {pipeline_mode = #tpu.pipeline_mode<synchronous>, transform_indices = @transform_1, window_bounds = array<i64: 32, 3>}, {pipeline_mode = #tpu.pipeline_mode<synchronous>, transform_indices = @transform_2, window_bounds = array<i64: 32, 1>}, {pipeline_mode = #tpu.pipeline_mode<synchronous>, transform_indices = @transform_3, window_bounds = array<i64: 4, 32>}, {pipeline_mode = #tpu.pipeline_mode<synchronous>, transform_indices = @transform_4, window_bounds = array<i64: 4, 1>}, {transform_indices = @transform_5, window_bounds = array<i64: 3, 512>}, {transform_indices = @transform_6, window_bounds = array<i64: 1, 512>}]} {
    %c0 = arith.constant 0 : index
    %c0_0 = arith.constant 0 : index
    %0 = vector.load %arg1[%c0, %c0_0] : memref<3x512xbf16, #tpu.memory_space<vmem>>, vector<3x512xbf16>
    %1 = arith.extf %0 : vector<3x512xbf16> to vector<3x512xf32>
    %c0_1 = arith.constant 0 : index
    %c0_2 = arith.constant 0 : index
    %2 = vector.load %arg2[%c0_1, %c0_2] : memref<32x3xf32, #tpu.memory_space<vmem>>, vector<32x3xf32>
    %c0_3 = arith.constant 0 : index
    %c0_4 = arith.constant 0 : index
    %3 = vector.load %arg3[%c0_3, %c0_4] : memref<32x1xf32, #tpu.memory_space<vmem>>, vector<32x1xf32>
    %4 = vector.extract_strided_slice %2 {offsets = [0, 0], sizes = [32, 1], strides = [1, 1]} : vector<32x3xf32> to vector<32x1xf32>
    %5 = vector.extract_strided_slice %1 {offsets = [0, 0], sizes = [1, 512], strides = [1, 1]} : vector<3x512xf32> to vector<1x512xf32>
    %6 = vector.broadcast %4 : vector<32x1xf32> to vector<32x512xf32>
    %7 = vector.broadcast %5 : vector<1x512xf32> to vector<32x512xf32>
    %8 = arith.mulf %6, %7 : vector<32x512xf32>
    %9 = vector.broadcast %3 : vector<32x1xf32> to vector<32x512xf32>
    %10 = arith.addf %9, %8 : vector<32x512xf32>
    %11 = vector.extract_strided_slice %2 {offsets = [0, 1], sizes = [32, 1], strides = [1, 1]} : vector<32x3xf32> to vector<32x1xf32>
    %12 = vector.extract_strided_slice %1 {offsets = [1, 0], sizes = [1, 512], strides = [1, 1]} : vector<3x512xf32> to vector<1x512xf32>
    %13 = vector.broadcast %11 : vector<32x1xf32> to vector<32x512xf32>
    %14 = vector.broadcast %12 : vector<1x512xf32> to vector<32x512xf32>
    %15 = arith.mulf %13, %14 : vector<32x512xf32>
    %16 = arith.addf %10, %15 : vector<32x512xf32>
    %17 = vector.extract_strided_slice %2 {offsets = [0, 2], sizes = [32, 1], strides = [1, 1]} : vector<32x3xf32> to vector<32x1xf32>
    %18 = vector.extract_strided_slice %1 {offsets = [2, 0], sizes = [1, 512], strides = [1, 1]} : vector<3x512xf32> to vector<1x512xf32>
    %19 = vector.broadcast %17 : vector<32x1xf32> to vector<32x512xf32>
    %20 = vector.broadcast %18 : vector<1x512xf32> to vector<32x512xf32>
    %21 = arith.mulf %19, %20 : vector<32x512xf32>
    %22 = arith.addf %16, %21 : vector<32x512xf32>
    %cst = arith.constant 0.000000e+00 : f32
    %23 = vector.broadcast %cst : f32 to vector<32x512xf32>
    %24 = arith.maximumf %22, %23 : vector<32x512xf32>
    %c0_5 = arith.constant 0 : index
    %c0_6 = arith.constant 0 : index
    %25 = vector.load %arg4[%c0_5, %c0_6] : memref<4x32xf32, #tpu.memory_space<vmem>>, vector<4x32xf32>
    %cst_7 = arith.constant dense<0.000000e+00> : vector<4x512xf32>
    %26 = tpu.matmul %25, %24, %cst_7 {dimension_numbers = #tpu.dot_dimension_numbers<[1], [0], [0], [1], [0, 0, 1, 1], [], []>} : vector<4x32xf32>, vector<32x512xf32>, vector<4x512xf32> -> vector<4x512xf32>
    %c0_8 = arith.constant 0 : index
    %c0_9 = arith.constant 0 : index
    %27 = vector.load %arg5[%c0_8, %c0_9] : memref<4x1xf32, #tpu.memory_space<vmem>>, vector<4x1xf32>
    %28 = vector.broadcast %27 : vector<4x1xf32> to vector<4x512xf32>
    %29 = arith.addf %26, %28 : vector<4x512xf32>
    %30 = vector.extract_strided_slice %29 {offsets = [0, 0], sizes = [3, 512], strides = [1, 1]} : vector<4x512xf32> to vector<3x512xf32>
    %31 = arith.negf %30 : vector<3x512xf32>
    %32 = math.exp %31 : vector<3x512xf32>
    %cst_10 = arith.constant 1.000000e+00 : f32
    %33 = vector.broadcast %cst_10 : f32 to vector<3x512xf32>
    %34 = arith.addf %33, %32 : vector<3x512xf32>
    %35 = arith.divf %33, %34 : vector<3x512xf32>
    %c0_11 = arith.constant 0 : index
    %c0_12 = arith.constant 0 : index
    %36 = vector.load %arg6[%c0_11, %c0_12] : memref<3x512xf32, #tpu.memory_space<vmem>>, vector<3x512xf32>
    tpu.vector_store %arg6[%c0_11, %c0_12], %35 {strides = array<i32>} : memref<3x512xf32, #tpu.memory_space<vmem>>, vector<3x512xf32>,
    %37 = vector.extract_strided_slice %29 {offsets = [3, 0], sizes = [1, 512], strides = [1, 1]} : vector<4x512xf32> to vector<1x512xf32>
    %cst_13 = arith.constant 0.000000e+00 : f32
    %38 = vector.broadcast %cst_13 : f32 to vector<1x512xf32>
    %39 = arith.maximumf %37, %38 : vector<1x512xf32>
    %c0_14 = arith.constant 0 : index
    %c0_15 = arith.constant 0 : index
    %40 = vector.load %arg7[%c0_14, %c0_15] : memref<1x512xf32, #tpu.memory_space<vmem>>, vector<1x512xf32>
    tpu.vector_store %arg7[%c0_14, %c0_15], %39 {strides = array<i32>} : memref<1x512xf32, #tpu.memory_space<vmem>>, vector<1x512xf32>,
    return
  }
  func.func @transform_0(%arg0: i32) -> (i32, i32) {
    %c0_i32 = arith.constant 0 : i32
    %c0_i32_0 = arith.constant 0 : i32
    return %c0_i32, %arg0 : i32, i32
  }
  func.func @transform_1(%arg0: i32) -> (i32, i32) {
    %c0_i32 = arith.constant 0 : i32
    %c0_i32_0 = arith.constant 0 : i32
    %c0_i32_1 = arith.constant 0 : i32
    return %c0_i32, %c0_i32_0 : i32, i32
  }
  func.func @transform_2(%arg0: i32) -> (i32, i32) {
    %c0_i32 = arith.constant 0 : i32
    %c0_i32_0 = arith.constant 0 : i32
    %c0_i32_1 = arith.constant 0 : i32
    return %c0_i32, %c0_i32_0 : i32, i32
  }
  func.func @transform_3(%arg0: i32) -> (i32, i32) {
    %c0_i32 = arith.constant 0 : i32
    %c0_i32_0 = arith.constant 0 : i32
    %c0_i32_1 = arith.constant 0 : i32
    return %c0_i32, %c0_i32_0 : i32, i32
  }
  func.func @transform_4(%arg0: i32) -> (i32, i32) {
    %c0_i32 = arith.constant 0 : i32
    %c0_i32_0 = arith.constant 0 : i32
    %c0_i32_1 = arith.constant 0 : i32
    return %c0_i32, %c0_i32_0 : i32, i32
  }
  func.func @transform_5(%arg0: i32) -> (i32, i32) {
    %c0_i32 = arith.constant 0 : i32
    %c0_i32_0 = arith.constant 0 : i32
    return %c0_i32, %arg0 : i32, i32
  }
  func.func @transform_6(%arg0: i32) -> (i32, i32) {
    %c0_i32 = arith.constant 0 : i32
    %c0_i32_0 = arith.constant 0 : i32
    return %c0_i32, %arg0 : i32, i32
  }
}

</mosaic_0001>

<llo_original>
// kernel: nef_mlp_pallas.1
$region0: #{nef_mlp_pallas.1}
  #allocation0 [shape = 'u32[]', space=smem, size = 0x4, offset = 0x4, fixed_abs, tag = 'smem constant byte address 0x4 - core index']
  #allocation1 [shape = 'u32[72,128]{1,0:T(1,128)}', space=vmem, size = 0x9000, scoped, tag = 'internal scratch']
  %s0 = inlined_call_operand.vmem [shape: bf16[3,1024], index: 0, kind: input, shape index: {}]
  %s1 = inlined_call_operand.vmem [shape: f32[32,3], index: 1, kind: input, shape index: {}]
  %s2 = inlined_call_operand.vmem [shape: f32[32,1], index: 2, kind: input, shape index: {}]
  %s3 = inlined_call_operand.vmem [shape: f32[4,32], index: 3, kind: input, shape index: {}]
  %s4 = inlined_call_operand.vmem [shape: f32[4,1], index: 4, kind: input, shape index: {}]
  %s5 = inlined_call_operand.hbm [shape: f32[3,1024], index: 5, kind: output, shape index: {0}]
  %s6 = inlined_call_operand.hbm [shape: f32[1,1024], index: 6, kind: output, shape index: {1}]
  %7 = xla_tuple %s5, %s6
  %s8 = sld [smem:[#allocation0]]
  $region61: #{nef_mlp_pallas.1} parent=0
    _
  %s10 = ssub.s32 1, %s8
  %s11 = scalar_select 0, %s10, %s8
  $region1: #{nef_mlp_pallas.1} parent=0
    #allocation2 [shape = 'u8[16384]{0}', space=vmem, size = 0x4000, scoped, tag = 'output window, operand 0']
    #allocation3 [shape = 's32[2]{0}', space=sflag, size = 0x8, scoped, tag = 'scoped memory for nef_mlp_pallas.1']
    #allocation4 [shape = 'u8[4096]{0}', space=vmem, size = 0x1000, scoped, tag = 'output window, operand 1']
    #allocation5 [shape = 's32[2]{0}', space=sflag, size = 0x8, scoped, tag = 'scoped memory for nef_mlp_pallas.1']
    %12 = vsyncpa [#allocation3], 0
    %s13 = scalar_lea.sflag [#allocation3], 1
    %14 = vsyncpa %s13, 0
    %15 = vsyncpa [#allocation5], 0
    %s16 = scalar_lea.sflag [#allocation5], 1
    %17 = vsyncpa %s16, 0
    loop: start=0, step=1, limit=4
    $region2: #{nef_mlp_pallas.1} parent=1 // loop_pre_header
      _
    $region3: #{nef_mlp_pallas.1} parent=1 // loop_header
      %s19 = sphi 0, %s23
      %p20 = scmp.ge.s32.totalorder %s19, 4
      %s29 = sphi 0, %s31
      %s32 = sphi 0, %s29
      %s33 = sphi 0, %s32
      %s49 = sphi 0, %s33
      %s53 = sphi 0, %s53
      %s55 = sphi 0, %s53
      %s56 = sphi 0, %s55
      %s70 = sphi 0, %s56
      %s74 = sphi 0, %s74
      %s76 = sphi 0, %s74
      %s77 = sphi 0, %s76
      %s91 = sphi 0, %s77
      %s95 = sphi 0, %s95
      %s97 = sphi 0, %s95
      %s98 = sphi 0, %s97
      %s112 = sphi 0, %s98
      %s116 = sphi 0, %s116
      %s118 = sphi 0, %s116
      %s119 = sphi 0, %s118
      %s133 = sphi 0, %s119
      %s139 = sphi 0, %s141
      %s142 = sphi 0, %s139
      %s143 = sphi 0, %s142
      %s159 = sphi 0, %s143
      %s165 = sphi 0, %s167
      %s168 = sphi 0, %s165
      %s169 = sphi 0, %s168
      %s185 = sphi 0, %s169
    $region4: #{nef_mlp_pallas.1} parent=1 // loop_header_branch
      %22 = sbr.rel (%p20) target = $region8
    $region5: #{nef_mlp_pallas.1} parent=1 // loop_body
      %s24 = ssub.s32 %s19, 1
      %s25 = ssub.s32 %s19, 2
      %s26 = sadd.s32 %s19, 1
      %s27 = ssub.s32 %s19, %s26
      %p28 = scmp.eq.s32.totalorder %s27, 0
      %s30 = sadd.s32 %s29, 1
      %s31 = scalar_select %p28, %s29, %s30
      %p34 = pneg %p28
      %p35 = scmp.eq.s32.totalorder %s19, 1
      %p36 = por %p34, %p35
      %p37 = scmp.ne.s32.totalorder %s29, %s32
      %p38 = scmp.eq.s32.totalorder %s19, 0
      %p39 = por %p37, %p38
      %p40 = scmp.ne.s32.totalorder %s29, %s32
      %p41 = scmp.eq.s32.totalorder %s24, 1
      %p42 = por %p40, %p41
      %p43 = scmp.ne.s32.totalorder %s32, %s33
      %p44 = scmp.eq.s32.totalorder %s24, 0
      %p45 = por %p43, %p44
      %p46 = scmp.ne.s32.totalorder %s32, %s33
      %p47 = scmp.eq.s32.totalorder %s25, 1
      %p48 = por %p46, %p47
      %p50 = scmp.ne.s32.totalorder %s33, %s49
      %p51 = scmp.eq.s32.totalorder %s25, 0
      %p52 = por %p50, %p51
      %s54 = sadd.s32 %s53, 1
      %p57 = scmp.eq.s32.totalorder %s19, 1
      %p58 = scmp.ne.s32.totalorder %s53, %s55
      %p59 = scmp.eq.s32.totalorder %s19, 0
      %p60 = por %p58, %p59
      %p61 = scmp.ne.s32.totalorder %s53, %s55
      %p62 = scmp.eq.s32.totalorder %s24, 1
      %p63 = por %p61, %p62
      %p64 = scmp.ne.s32.totalorder %s55, %s56
      %p65 = scmp.eq.s32.totalorder %s24, 0
      %p66 = por %p64, %p65
      %p67 = scmp.ne.s32.totalorder %s55, %s56
      %p68 = scmp.eq.s32.totalorder %s25, 1
      %p69 = por %p67, %p68
      %p71 = scmp.ne.s32.totalorder %s56, %s70
      %p72 = scmp.eq.s32.totalorder %s25, 0
      %p73 = por %p71, %p72
      %s75 = sadd.s32 %s74, 1
      %p78 = scmp.eq.s32.totalorder %s19, 1
      %p79 = scmp.ne.s32.totalorder %s74, %s76
      %p80 = scmp.eq.s32.totalorder %s19, 0
      %p81 = por %p79, %p80
      %p82 = scmp.ne.s32.totalorder %s74, %s76
      %p83 = scmp.eq.s32.totalorder %s24, 1
      %p84 = por %p82, %p83
      %p85 = scmp.ne.s32.totalorder %s76, %s77
      %p86 = scmp.eq.s32.totalorder %s24, 0
      %p87 = por %p85, %p86
      %p88 = scmp.ne.s32.totalorder %s76, %s77
      %p89 = scmp.eq.s32.totalorder %s25, 1
      %p90 = por %p88, %p89
      %p92 = scmp.ne.s32.totalorder %s77, %s91
      %p93 = scmp.eq.s32.totalorder %s25, 0
      %p94 = por %p92, %p93
      %s96 = sadd.s32 %s95, 1
      %p99 = scmp.eq.s32.totalorder %s19, 1
      %p100 = scmp.ne.s32.totalorder %s95, %s97
      %p101 = scmp.eq.s32.totalorder %s19, 0
      %p102 = por %p100, %p101
      %p103 = scmp.ne.s32.totalorder %s95, %s97
      %p104 = scmp.eq.s32.totalorder %s24, 1
      %p105 = por %p103, %p104
      %p106 = scmp.ne.s32.totalorder %s97, %s98
      %p107 = scmp.eq.s32.totalorder %s24, 0
      %p108 = por %p106, %p107
      %p109 = scmp.ne.s32.totalorder %s97, %s98
      %p110 = scmp.eq.s32.totalorder %s25, 1
      %p111 = por %p109, %p110
      %p113 = scmp.ne.s32.totalorder %s98, %s112
      %p114 = scmp.eq.s32.totalorder %s25, 0
      %p115 = por %p113, %p114
      %s117 = sadd.s32 %s116, 1
      %p120 = scmp.eq.s32.totalorder %s19, 1
      %p121 = scmp.ne.s32.totalorder %s116, %s118
      %p122 = scmp.eq.s32.totalorder %s19, 0
      %p123 = por %p121, %p122
      %p124 = scmp.ne.s32.totalorder %s116, %s118
      %p125 = scmp.eq.s32.totalorder %s24, 1
      %p126 = por %p124, %p125
      %p127 = scmp.ne.s32.totalorder %s118, %s119
      %p128 = scmp.eq.s32.totalorder %s24, 0
      %p129 = por %p127, %p128
      %p130 = scmp.ne.s32.totalorder %s118, %s119
      %p131 = scmp.eq.s32.totalorder %s25, 1
      %p132 = por %p130, %p131
      %p134 = scmp.ne.s32.totalorder %s119, %s133
      %p135 = scmp.eq.s32.totalorder %s25, 0
      %p136 = por %p134, %p135
      %s137 = ssub.s32 %s19, %s26
      %p138 = scmp.eq.s32.totalorder %s137, 0
      %s140 = sadd.s32 %s139, 1
      %s141 = scalar_select %p138, %s139, %s140
      %p144 = pneg %p138
      %p145 = scmp.eq.s32.totalorder %s19, 1
      %p146 = por %p144, %p145
      %p147 = scmp.ne.s32.totalorder %s139, %s142
      %p148 = scmp.eq.s32.totalorder %s19, 0
      %p149 = por %p147, %p148
      %p150 = scmp.ne.s32.totalorder %s139, %s142
      %p151 = scmp.eq.s32.totalorder %s24, 1
      %p152 = por %p150, %p151
      %p153 = scmp.ne.s32.totalorder %s142, %s143
      %p154 = scmp.eq.s32.totalorder %s24, 0
      %p155 = por %p153, %p154
      %p156 = scmp.ne.s32.totalorder %s142, %s143
      %p157 = scmp.eq.s32.totalorder %s25, 1
      %p158 = por %p156, %p157
      %p160 = scmp.ne.s32.totalorder %s143, %s159
      %p161 = scmp.eq.s32.totalorder %s25, 0
      %p162 = por %p160, %p161
      %s163 = ssub.s32 %s19, %s26
      %p164 = scmp.eq.s32.totalorder %s163, 0
      %s166 = sadd.s32 %s165, 1
      %s167 = scalar_select %p164, %s165, %s166
      %p170 = pneg %p164
      %p171 = scmp.eq.s32.totalorder %s19, 1
      %p172 = por %p170, %p171
      %p173 = scmp.ne.s32.totalorder %s165, %s168
      %p174 = scmp.eq.s32.totalorder %s19, 0
      %p175 = por %p173, %p174
      %p176 = scmp.ne.s32.totalorder %s165, %s168
      %p177 = scmp.eq.s32.totalorder %s24, 1
      %p178 = por %p176, %p177
      %p179 = scmp.ne.s32.totalorder %s168, %s169
      %p180 = scmp.eq.s32.totalorder %s24, 0
      %p181 = por %p179, %p180
      %p182 = scmp.ne.s32.totalorder %s168, %s169
      %p183 = scmp.eq.s32.totalorder %s25, 1
      %p184 = por %p182, %p183
      %p186 = scmp.ne.s32.totalorder %s169, %s185
      %p187 = scmp.eq.s32.totalorder %s25, 0
      %p188 = por %p186, %p187
      %p189 = scmp.le.s32.totalorder 1, %s19
      %p190 = scmp.lt.s32.totalorder %s19, 3
      %p191 = pnand %p189, %p190
      %p192 = pneg %p191
      // Predicated region
      $region9: #{nef_mlp_pallas.1} parent=5 // pred_check
        _
      $region10: #{nef_mlp_pallas.1} parent=5 // pred_check_branch
        %194 = sbr.rel (%p191) target = $region12
      $region11: #{nef_mlp_pallas.1} parent=5 // pred_region
        %s195 = ssub.s32 %s19, 1
        // Predicated region
        $region13: #{nef_mlp_pallas.1} parent=11 // pred_check
          %p196 = pneg %p66
        $region14: #{nef_mlp_pallas.1} parent=11 // pred_check_branch
          %198 = sbr.rel (%p196) target = $region16
        $region15: #{nef_mlp_pallas.1} parent=11 // pred_region
          _
        $region16: #{nef_mlp_pallas.1} parent=11 // pred_fallthru
          _
        // Predicated region
        $region17: #{nef_mlp_pallas.1} parent=11 // pred_check
          %p199 = pneg %p87
        $region18: #{nef_mlp_pallas.1} parent=11 // pred_check_branch
          %201 = sbr.rel (%p199) target = $region20
        $region19: #{nef_mlp_pallas.1} parent=11 // pred_region
          _
        $region20: #{nef_mlp_pallas.1} parent=11 // pred_fallthru
          _
        // Predicated region
        $region21: #{nef_mlp_pallas.1} parent=11 // pred_check
          %p202 = pneg %p108
        $region22: #{nef_mlp_pallas.1} parent=11 // pred_check_branch
          %204 = sbr.rel (%p202) target = $region24
        $region23: #{nef_mlp_pallas.1} parent=11 // pred_region
          _
        $region24: #{nef_mlp_pallas.1} parent=11 // pred_fallthru
          _
        // Predicated region
        $region25: #{nef_mlp_pallas.1} parent=11 // pred_check
          %p205 = pneg %p129
        $region26: #{nef_mlp_pallas.1} parent=11 // pred_check_branch
          %207 = sbr.rel (%p205) target = $region28
        $region27: #{nef_mlp_pallas.1} parent=11 // pred_region
          _
        $region28: #{nef_mlp_pallas.1} parent=11 // pred_fallthru
          _
      $region12: #{nef_mlp_pallas.1} parent=5 // pred_fallthru
        _
      %p208 = scmp.lt.s32.totalorder %s19, 2
      // Predicated region
      $region29: #{nef_mlp_pallas.1} parent=5 // pred_check
        %p209 = pneg %p208
      $region30: #{nef_mlp_pallas.1} parent=5 // pred_check_branch
        %211 = sbr.rel (%p209) target = $region32
      $region31: #{nef_mlp_pallas.1} parent=5 // pred_region
        // Predicated region
        $region33: #{nef_mlp_pallas.1} parent=31 // pred_check
          %p212 = pneg %p39
        $region34: #{nef_mlp_pallas.1} parent=31 // pred_check_branch
          %214 = sbr.rel (%p212) target = $region36
        $region35: #{nef_mlp_pallas.1} parent=31 // pred_region
          %s215 = smul.u32 4, %s19
          %p216 = scmp.lt.s32.totalorder %s215, 7
          %s217 = scalar_select %p216, %s215, 7
          %s218 = smul.addr %s217, 2
          %s219 = scalar_lea.vmem %s0, %s218
          %s220 = smul.u32 4, %s19
        $region36: #{nef_mlp_pallas.1} parent=31 // pred_fallthru
          _
      $region32: #{nef_mlp_pallas.1} parent=5 // pred_fallthru
        _
      %p221 = scmp.le.s32.totalorder 1, %s19
      %p222 = scmp.lt.s32.totalorder %s19, 3
      %p223 = pnand %p221, %p222
      %p224 = pneg %p223
      // Predicated region
      $region37: #{nef_mlp_pallas.1} parent=5 // pred_check
        _
      $region38: #{nef_mlp_pallas.1} parent=5 // pred_check_branch
        %226 = sbr.rel (%p223) target = $region40
      $region39: #{nef_mlp_pallas.1} parent=5 // pred_region
        %s227 = ssub.s32 %s19, 1
        %s228 = smul.u32 4, %s24
        %p229 = scmp.lt.s32.totalorder %s228, 7
        %s230 = scalar_select %p229, %s228, 7
        %s231 = smul.addr %s230, 2
        %s232 = scalar_lea.vmem %s0, %s231
        %p233 = pneg %p45
        %p234 = pneg %p42
        %p235 = pneg %p66
        %p236 = pneg %p63
        %p237 = pneg %p87
        %p238 = pneg %p84
        %p239 = pneg %p108
        %p240 = pneg %p105
        %p241 = pneg %p129
        %p242 = pneg %p126
        %p243 = pneg %p155
        %p244 = pneg %p152
        %s245 = sand.u32 %s142, 1
        %s246 = scalar_lea.sflag [#allocation3], %s245
        %s247 = sand.u32 %s142, 1
        %s248 = smul.addr %s247, 16
        %s249 = scalar_lea.vmem [#allocation2], %s248
        %p250 = pneg %p181
        %p251 = pneg %p178
        %s252 = sand.u32 %s168, 1
        %s253 = scalar_lea.sflag [#allocation5], %s252
        %s254 = sand.u32 %s168, 1
        %s255 = smul.addr %s254, 4
        %s256 = scalar_lea.vmem [#allocation4], %s255
        %s257 = smul.u32 4, %s24
        %p258 = scmp.lt.s32.totalorder %s257, 7
        %s259 = scalar_select %p258, %s257, 7
        %s260 = smul.addr %s259, 2
        %s261 = scalar_lea.vmem %s0, %s260
        %s262 = smul.u32 4, %s24
        %s263 = smul.u32 4, %s24
        %s264 = smul.u32 4, %s24
        %v265 = vld [vmem:[%s261] sm:$0xff]
        %v266 = vunpack.c.l.bf16 %v265
        %v267 = vunpack.c.h.bf16 %v265
        %v268 = vld [vmem:[%s1] sm:$0xff]
        %v269 = vld [vmem:[%s1 + $0x8] sm:$0xff]
        %v270 = vld [vmem:[%s1 + $0x10] sm:$0xff]
        %v271 = vld [vmem:[%s1 + $0x18] sm:$0xff]
        %v272 = vld [vmem:[%s2] sm:$0xff]
        %v273 = vld [vmem:[%s2 + $0x8] sm:$0xff]
        %v274 = vld [vmem:[%s2 + $0x10] sm:$0xff]
        %v275 = vld [vmem:[%s2 + $0x18] sm:$0xff]
        %277 = vset.pattern.permute.xlu0 0
        %278 = vperm.xlu0 %277, %v268
        %v279 = vpop.permute.xlu0 %278
        %282 = vset.pattern.permute.xlu0 0
        %283 = vperm.xlu0 %282, %v269
        %v284 = vpop.permute.xlu0 %283
        %287 = vset.pattern.permute.xlu0 0
        %288 = vperm.xlu0 %287, %v270
        %v289 = vpop.permute.xlu0 %288
        %292 = vset.pattern.permute.xlu0 0
        %293 = vperm.xlu0 %292, %v271
        %v294 = vpop.permute.xlu0 %293
        %v298 = vperm.slane %v266, 0
        %v299 = vperm.slane %v266, 4
        %v300 = vperm.slane %v267, 0
        %v301 = vperm.slane %v267, 4
        %v306 = vperm.slane %v298, 0
        %v307 = vperm.slane %v299, 0
        %v308 = vperm.slane %v300, 0
        %v309 = vperm.slane %v301, 0
        %v310 = vmul.f32 %v279, %v306
        %v311 = vmul.f32 %v279, %v307
        %v312 = vmul.f32 %v279, %v308
        %v313 = vmul.f32 %v279, %v309
        %v314 = vmul.f32 %v284, %v306
        %v315 = vmul.f32 %v284, %v307
        %v316 = vmul.f32 %v284, %v308
        %v317 = vmul.f32 %v284, %v309
        %v318 = vmul.f32 %v289, %v306
        %v319 = vmul.f32 %v289, %v307
        %v320 = vmul.f32 %v289, %v308
        %v321 = vmul.f32 %v289, %v309
        %v322 = vmul.f32 %v294, %v306
        %v323 = vmul.f32 %v294, %v307
        %v324 = vmul.f32 %v294, %v308
        %v325 = vmul.f32 %v294, %v309
        %327 = vset.pattern.permute.xlu0 0
        %328 = vperm.xlu0 %327, %v272
        %v329 = vpop.permute.xlu0 %328
        %332 = vset.pattern.permute.xlu0 0
        %333 = vperm.xlu0 %332, %v273
        %v334 = vpop.permute.xlu0 %333
        %337 = vset.pattern.permute.xlu0 0
        %338 = vperm.xlu0 %337, %v274
        %v339 = vpop.permute.xlu0 %338
        %342 = vset.pattern.permute.xlu0 0
        %343 = vperm.xlu0 %342, %v275
        %v344 = vpop.permute.xlu0 %343
        %v346 = vadd.f32 %v329, %v310
        %v347 = vadd.f32 %v329, %v311
        %v348 = vadd.f32 %v329, %v312
        %v349 = vadd.f32 %v329, %v313
        %v350 = vadd.f32 %v334, %v314
        %v351 = vadd.f32 %v334, %v315
        %v352 = vadd.f32 %v334, %v316
        %v353 = vadd.f32 %v334, %v317
        %v354 = vadd.f32 %v339, %v318
        %v355 = vadd.f32 %v339, %v319
        %v356 = vadd.f32 %v339, %v320
        %v357 = vadd.f32 %v339, %v321
        %v358 = vadd.f32 %v344, %v322
        %v359 = vadd.f32 %v344, %v323
        %v360 = vadd.f32 %v344, %v324
        %v361 = vadd.f32 %v344, %v325
        %362 = vset.pattern.permute.xlu0 1
        %363 = vperm.xlu0 %362, %v268
        %v364 = vpop.permute.xlu0 %363
        %366 = vset.pattern.permute.xlu0 1
        %367 = vperm.xlu0 %366, %v269
        %v368 = vpop.permute.xlu0 %367
        %370 = vset.pattern.permute.xlu0 1
        %371 = vperm.xlu0 %370, %v270
        %v372 = vpop.permute.xlu0 %371
        %374 = vset.pattern.permute.xlu0 1
        %375 = vperm.xlu0 %374, %v271
        %v376 = vpop.permute.xlu0 %375
        %v378 = vperm.slane %v266, 1
        %v379 = vperm.slane %v266, 5
        %v380 = vperm.slane %v267, 1
        %v381 = vperm.slane %v267, 5
        %v386 = vperm.slane %v378, 1
        %v387 = vperm.slane %v379, 1
        %v388 = vperm.slane %v380, 1
        %v389 = vperm.slane %v381, 1
        %v390 = vmul.f32 %v364, %v386
        %v391 = vmul.f32 %v364, %v387
        %v392 = vmul.f32 %v364, %v388
        %v393 = vmul.f32 %v364, %v389
        %v394 = vmul.f32 %v368, %v386
        %v395 = vmul.f32 %v368, %v387
        %v396 = vmul.f32 %v368, %v388
        %v397 = vmul.f32 %v368, %v389
        %v398 = vmul.f32 %v372, %v386
        %v399 = vmul.f32 %v372, %v387
        %v400 = vmul.f32 %v372, %v388
        %v401 = vmul.f32 %v372, %v389
        %v402 = vmul.f32 %v376, %v386
        %v403 = vmul.f32 %v376, %v387
        %v404 = vmul.f32 %v376, %v388
        %v405 = vmul.f32 %v376, %v389
        %v406 = vadd.f32 %v346, %v390
        %v407 = vadd.f32 %v347, %v391
        %v408 = vadd.f32 %v348, %v392
        %v409 = vadd.f32 %v349, %v393
        %v410 = vadd.f32 %v350, %v394
        %v411 = vadd.f32 %v351, %v395
        %v412 = vadd.f32 %v352, %v396
        %v413 = vadd.f32 %v353, %v397
        %v414 = vadd.f32 %v354, %v398
        %v415 = vadd.f32 %v355, %v399
        %v416 = vadd.f32 %v356, %v400
        %v417 = vadd.f32 %v357, %v401
        %v418 = vadd.f32 %v358, %v402
        %v419 = vadd.f32 %v359, %v403
        %v420 = vadd.f32 %v360, %v404
        %v421 = vadd.f32 %v361, %v405
        %422 = vset.pattern.permute.xlu0 2
        %423 = vperm.xlu0 %422, %v268
        %v424 = vpop.permute.xlu0 %423
        %426 = vset.pattern.permute.xlu0 2
        %427 = vperm.xlu0 %426, %v269
        %v428 = vpop.permute.xlu0 %427
        %430 = vset.pattern.permute.xlu0 2
        %431 = vperm.xlu0 %430, %v270
        %v432 = vpop.permute.xlu0 %431
        %434 = vset.pattern.permute.xlu0 2
        %435 = vperm.xlu0 %434, %v271
        %v436 = vpop.permute.xlu0 %435
        %v438 = vperm.slane %v266, 2
        %v439 = vperm.slane %v266, 6
        %v440 = vperm.slane %v267, 2
        %v441 = vperm.slane %v267, 6
        %v446 = vperm.slane %v438, 2
        %v447 = vperm.slane %v439, 2
        %v448 = vperm.slane %v440, 2
        %v449 = vperm.slane %v441, 2
        %v450 = vmul.f32 %v424, %v446
        %v451 = vmul.f32 %v424, %v447
        %v452 = vmul.f32 %v424, %v448
        %v453 = vmul.f32 %v424, %v449
        %v454 = vmul.f32 %v428, %v446
        %v455 = vmul.f32 %v428, %v447
        %v456 = vmul.f32 %v428, %v448
        %v457 = vmul.f32 %v428, %v449
        %v458 = vmul.f32 %v432, %v446
        %v459 = vmul.f32 %v432, %v447
        %v460 = vmul.f32 %v432, %v448
        %v461 = vmul.f32 %v432, %v449
        %v462 = vmul.f32 %v436, %v446
        %v463 = vmul.f32 %v436, %v447
        %v464 = vmul.f32 %v436, %v448
        %v465 = vmul.f32 %v436, %v449
        %v466 = vadd.f32 %v406, %v450
        %v467 = vadd.f32 %v407, %v451
        %v468 = vadd.f32 %v408, %v452
        %v469 = vadd.f32 %v409, %v453
        %v470 = vadd.f32 %v410, %v454
        %v471 = vadd.f32 %v411, %v455
        %v472 = vadd.f32 %v412, %v456
        %v473 = vadd.f32 %v413, %v457
        %v474 = vadd.f32 %v414, %v458
        %v475 = vadd.f32 %v415, %v459
        %v476 = vadd.f32 %v416, %v460
        %v477 = vadd.f32 %v417, %v461
        %v478 = vadd.f32 %v418, %v462
        %v479 = vadd.f32 %v419, %v463
        %v480 = vadd.f32 %v420, %v464
        %v481 = vadd.f32 %v421, %v465
        %v482 = vmax.f32 %v466, 0.0
        %v483 = vmax.f32 %v467, 0.0
        %v484 = vmax.f32 %v468, 0.0
        %v485 = vmax.f32 %v469, 0.0
        %v486 = vmax.f32 %v470, 0.0
        %v487 = vmax.f32 %v471, 0.0
        %v488 = vmax.f32 %v472, 0.0
        %v489 = vmax.f32 %v473, 0.0
        %v490 = vmax.f32 %v474, 0.0
        %v491 = vmax.f32 %v475, 0.0
        %v492 = vmax.f32 %v476, 0.0
        %v493 = vmax.f32 %v477, 0.0
        %v494 = vmax.f32 %v478, 0.0
        %v495 = vmax.f32 %v479, 0.0
        %v496 = vmax.f32 %v480, 0.0
        %v497 = vmax.f32 %v481, 0.0
        %v498 = vld [vmem:[%s3] sm:$0xf]
        %v499 = vld [vmem:[%s4] sm:$0xf]
        %501 = vset.pattern.permute.xlu0 0
        %502 = vperm.xlu0 %501, %v499
        %v503 = vpop.permute.xlu0 %502
        %vm505 = vcmask 261120
        %v507 = vsel %vm505, %v498, 0
        %509 = vmatpush.msra.mxu0 0.0
        %510 = vmatpush.msra.mxu0 0.0
        %511 = vmatpush.msra.mxu0 0.0
        %512 = vmatpush.msra.mxu0 0.0
        %513 = vmatpush.msra.mxu0 0.0
        %514 = vmatpush.msra.mxu0 0.0
        %515 = vmatpush.msra.mxu0 0.0
        %516 = vmatpush.msra.mxu0 0.0
        %517 = vmatpush.msra.mxu0 0.0
        %518 = vmatpush.msra.mxu0 0.0
        %519 = vmatpush.msra.mxu0 0.0
        %520 = vmatpush.msra.mxu0 0.0
        %521 = vmatpush.msra.mxu0 %v494
        %522 = vmatpush.msra.mxu0 %v490
        %523 = vmatpush.msra.mxu0 %v486
        %524 = vmatpush.msra.mxu0 %v482
        %525 = vmatmul.f32.gmra.mxu0 %v507
        %v526 = vpop.f32.mrf.mxu0
        %v527 = vadd.f32 %v503, %v526
        %528 = vdwg.mxu0
        %529 = vmatpush.msra.mxu0 0.0
        %530 = vmatpush.msra.mxu0 0.0
        %531 = vmatpush.msra.mxu0 0.0
        %532 = vmatpush.msra.mxu0 0.0
        %533 = vmatpush.msra.mxu0 0.0
        %534 = vmatpush.msra.mxu0 0.0
        %535 = vmatpush.msra.mxu0 0.0
        %536 = vmatpush.msra.mxu0 0.0
        %537 = vmatpush.msra.mxu0 0.0
        %538 = vmatpush.msra.mxu0 0.0
        %539 = vmatpush.msra.mxu0 0.0
        %540 = vmatpush.msra.mxu0 0.0
        %541 = vmatpush.msra.mxu0 %v495
        %542 = vmatpush.msra.mxu0 %v491
        %543 = vmatpush.msra.mxu0 %v487
        %544 = vmatpush.msra.mxu0 %v483
        %545 = vmatmul.f32.gmra.mxu0 %v507
        %v546 = vpop.f32.mrf.mxu0
        %v547 = vadd.f32 %v503, %v546
        %548 = vdwg.mxu0
        %549 = vmatpush.msra.mxu0 0.0
        %550 = vmatpush.msra.mxu0 0.0
        %551 = vmatpush.msra.mxu0 0.0
        %552 = vmatpush.msra.mxu0 0.0
        %553 = vmatpush.msra.mxu0 0.0
        %554 = vmatpush.msra.mxu0 0.0
        %555 = vmatpush.msra.mxu0 0.0
        %556 = vmatpush.msra.mxu0 0.0
        %557 = vmatpush.msra.mxu0 0.0
        %558 = vmatpush.msra.mxu0 0.0
        %559 = vmatpush.msra.mxu0 0.0
        %560 = vmatpush.msra.mxu0 0.0
        %561 = vmatpush.msra.mxu0 %v496
        %562 = vmatpush.msra.mxu0 %v492
        %563 = vmatpush.msra.mxu0 %v488
        %564 = vmatpush.msra.mxu0 %v484
        %565 = vmatmul.f32.gmra.mxu0 %v507
        %v566 = vpop.f32.mrf.mxu0
        %v567 = vadd.f32 %v503, %v566
        %568 = vdwg.mxu0
        %569 = vmatpush.msra.mxu0 0.0
        %570 = vmatpush.msra.mxu0 0.0
        %571 = vmatpush.msra.mxu0 0.0
        %572 = vmatpush.msra.mxu0 0.0
        %573 = vmatpush.msra.mxu0 0.0
        %574 = vmatpush.msra.mxu0 0.0
        %575 = vmatpush.msra.mxu0 0.0
        %576 = vmatpush.msra.mxu0 0.0
        %577 = vmatpush.msra.mxu0 0.0
        %578 = vmatpush.msra.mxu0 0.0
        %579 = vmatpush.msra.mxu0 0.0
        %580 = vmatpush.msra.mxu0 0.0
        %581 = vmatpush.msra.mxu0 %v497
        %582 = vmatpush.msra.mxu0 %v493
        %583 = vmatpush.msra.mxu0 %v489
        %584 = vmatpush.msra.mxu0 %v485
        %585 = vmatmul.f32.gmra.mxu0 %v507
        %v586 = vpop.f32.mrf.mxu0
        %v587 = vadd.f32 %v503, %v586
        %588 = vdwg.mxu0
        %v589 = vxor.u32 %v527, 2147483648
        %v590 = vxor.u32 %v547, 2147483648
        %v591 = vxor.u32 %v567, 2147483648
        %v592 = vxor.u32 %v587, 2147483648
        %v593 = vmul.f32 %v589, 1.442695
        %v594 = vpow.pop %v593
        %v595 = vmul.f32 %v590, 1.442695
        %v596 = vpow.pop %v595
        %v597 = vmul.f32 %v591, 1.442695
        %v598 = vpow.pop %v597
        %v599 = vmul.f32 %v592, 1.442695
        %v600 = vpow.pop %v599
        %v601 = vadd.f32 %v594, 1.0
        %v602 = vadd.f32 %v596, 1.0
        %v603 = vadd.f32 %v598, 1.0
        %v604 = vadd.f32 %v600, 1.0
        %v605 = vrcp.pop %v601
        %v606 = vmul.f32 %v601, %v605
        %v607 = vsub.f32 1.0, %v606
        %v608 = vmul.f32 %v605, %v607
        %v609 = vadd.f32 %v605, %v608
        %vm610 = vweird.f32 %v601
        %vm611 = vweird.f32 %v605
        %vm612 = vmor %vm610, %vm611
        %v613 = vsel %vm612, %v605, %v609
        %v614 = vand.u32 2147483647, %v601
        %vm615 = vcmp.eq.f32.partialorder %v614, 8.507059e+37
        %v616 = vand.u32 %v601, 2147483648
        %v617 = vor.u32 1.1754944e-38, %v616
        %v618 = vsel %vm615, %v617, %v613
        %v619 = vmul.f32 1.0, %v618
        %v620 = vrcp.pop %v602
        %v621 = vmul.f32 %v602, %v620
        %v622 = vsub.f32 1.0, %v621
        %v623 = vmul.f32 %v620, %v622
        %v624 = vadd.f32 %v620, %v623
        %vm625 = vweird.f32 %v602
        %vm626 = vweird.f32 %v620
        %vm627 = vmor %vm625, %vm626
        %v628 = vsel %vm627, %v620, %v624
        %v629 = vand.u32 2147483647, %v602
        %vm630 = vcmp.eq.f32.partialorder %v629, 8.507059e+37
        %v631 = vand.u32 %v602, 2147483648
        %v632 = vor.u32 1.1754944e-38, %v631
        %v633 = vsel %vm630, %v632, %v628
        %v634 = vmul.f32 1.0, %v633
        %v635 = vrcp.pop %v603
        %v636 = vmul.f32 %v603, %v635
        %v637 = vsub.f32 1.0, %v636
        %v638 = vmul.f32 %v635, %v637
        %v639 = vadd.f32 %v635, %v638
        %vm640 = vweird.f32 %v603
        %vm641 = vweird.f32 %v635
        %vm642 = vmor %vm640, %vm641
        %v643 = vsel %vm642, %v635, %v639
        %v644 = vand.u32 2147483647, %v603
        %vm645 = vcmp.eq.f32.partialorder %v644, 8.507059e+37
        %v646 = vand.u32 %v603, 2147483648
        %v647 = vor.u32 1.1754944e-38, %v646
        %v648 = vsel %vm645, %v647, %v643
        %v649 = vmul.f32 1.0, %v648
        %v650 = vrcp.pop %v604
        %v651 = vmul.f32 %v604, %v650
        %v652 = vsub.f32 1.0, %v651
        %v653 = vmul.f32 %v650, %v652
        %v654 = vadd.f32 %v650, %v653
        %vm655 = vweird.f32 %v604
        %vm656 = vweird.f32 %v650
        %vm657 = vmor %vm655, %vm656
        %v658 = vsel %vm657, %v650, %v654
        %v659 = vand.u32 2147483647, %v604
        %vm660 = vcmp.eq.f32.partialorder %v659, 8.507059e+37
        %v661 = vand.u32 %v604, 2147483648
        %v662 = vor.u32 1.1754944e-38, %v661
        %v663 = vsel %vm660, %v662, %v658
        %v664 = vmul.f32 1.0, %v663
        %v669 = vrot.slane %v634, 4
        %v670 = vrot.slane %v664, 4
        %vm671 = vcmask 1043456
        %v672 = vsel %vm671, %v619, %v669
        %v673 = vsel %vm671, %v649, %v670
        %676 = vst [vmem:[%s249] sm:$0x77] %v672
        %677 = vst [vmem:[%s249 + $0x8] sm:$0x77] %v673
        %v678 = vmax.f32 %v527, 0.0
        %v679 = vmax.f32 %v547, 0.0
        %v680 = vmax.f32 %v567, 0.0
        %v681 = vmax.f32 %v587, 0.0
        %686 = vst [vmem:[#allocation1] sm:$0xff] %v678
        %687 = vst [vmem:[#allocation1 + $0x9] sm:$0xff] %v679
        %688 = vst [vmem:[#allocation1 + $0x12] sm:$0xff] %v680
        %689 = vst [vmem:[#allocation1 + $0x1b] sm:$0xff] %v681
        %s690 = scalar_lea.vmem [#allocation1], 3
        %v691 = vld [vmem:[%s690] ss:$9 sm:$0xff]
        %v693 = vlaneseq
        %vm694 = vcmp.ge.s32.totalorder %v693, 0
        %vm695 = vcmp.lt.s32.totalorder %v693, 512
        %vm696 = vmand %vm694, %vm695
        %697 = vst.msk [vmem:[%s256] sm:$0xf] %vm696, %v691
        %s698 = sand.u32 %s142, 1
        %s699 = scalar_lea.sflag [#allocation3], %s698
        %s700 = sand.u32 %s142, 1
        %s701 = smul.addr %s700, 16
        %s702 = scalar_lea.vmem [#allocation2], %s701
        %s703 = sand.u32 %s168, 1
        %s704 = scalar_lea.sflag [#allocation5], %s703
        %s705 = sand.u32 %s168, 1
        %s706 = smul.addr %s705, 4
        %s707 = scalar_lea.vmem [#allocation4], %s706
        // Predicated region
        $region41: #{nef_mlp_pallas.1} parent=39 // pred_check
          %p708 = pneg %p152
        $region42: #{nef_mlp_pallas.1} parent=39 // pred_check_branch
          %710 = sbr.rel (%p708) target = $region44
        $region43: #{nef_mlp_pallas.1} parent=39 // pred_region
          %s711 = smul.u32 4, %s24
          %713 = vsyncadd %s699, 0
          %s714 = smul.addr %s711, 4
          %s715 = scalar_lea.hbm %s5, %s714
          %s717 = sshll.u32 %s702, 4
          %s718 = int_to_ptr.vmem [resolvable:$true] %s717
          %s719 = sshll.u32 %s715, 4
          %s720 = int_to_ptr.hbm [resolvable:$true] %s719
          %722 = dma.vmem_to_hbm [thread:$0]  %s718, 256, %s720, %s699
        $region44: #{nef_mlp_pallas.1} parent=39 // pred_fallthru
          _
        // Predicated region
        $region45: #{nef_mlp_pallas.1} parent=39 // pred_check
          %p723 = pneg %p178
        $region46: #{nef_mlp_pallas.1} parent=39 // pred_check_branch
          %725 = sbr.rel (%p723) target = $region48
        $region47: #{nef_mlp_pallas.1} parent=39 // pred_region
          %s726 = smul.u32 4, %s24
          %728 = vsyncadd %s704, 0
          %s729 = scalar_lea.hbm %s6, %s726
          %s731 = sshll.u32 %s707, 4
          %s732 = int_to_ptr.vmem [resolvable:$true] %s731
          %s733 = sshll.u32 %s729, 4
          %s734 = int_to_ptr.hbm [resolvable:$true] %s733
          %736 = dma.vmem_to_hbm [thread:$0]  %s732, 64, %s734, %s704
        $region48: #{nef_mlp_pallas.1} parent=39 // pred_fallthru
          _
      $region40: #{nef_mlp_pallas.1} parent=5 // pred_fallthru
        _
      %p737 = scmp.le.s32.totalorder 2, %s19
      // Predicated region
      $region49: #{nef_mlp_pallas.1} parent=5 // pred_check
        %p738 = pneg %p737
      $region50: #{nef_mlp_pallas.1} parent=5 // pred_check_branch
        %740 = sbr.rel (%p738) target = $region52
      $region51: #{nef_mlp_pallas.1} parent=5 // pred_region
        %s741 = ssub.s32 %s19, 2
        // Predicated region
        $region53: #{nef_mlp_pallas.1} parent=51 // pred_check
          %p742 = pneg %p158
        $region54: #{nef_mlp_pallas.1} parent=51 // pred_check_branch
          %744 = sbr.rel (%p742) target = $region56
        $region55: #{nef_mlp_pallas.1} parent=51 // pred_region
          %s745 = sand.u32 %s143, 1
          %s746 = scalar_lea.sflag [#allocation3], %s745
          %s747 = sand.u32 %s143, 1
          %s748 = smul.addr %s747, 16
          %s749 = scalar_lea.vmem [#allocation2], %s748
          %751 = dma.done %s746, 256
        $region56: #{nef_mlp_pallas.1} parent=51 // pred_fallthru
          _
        // Predicated region
        $region57: #{nef_mlp_pallas.1} parent=51 // pred_check
          %p752 = pneg %p184
        $region58: #{nef_mlp_pallas.1} parent=51 // pred_check_branch
          %754 = sbr.rel (%p752) target = $region60
        $region59: #{nef_mlp_pallas.1} parent=51 // pred_region
          %s755 = sand.u32 %s169, 1
          %s756 = scalar_lea.sflag [#allocation5], %s755
          %s757 = sand.u32 %s169, 1
          %s758 = smul.addr %s757, 4
          %s759 = scalar_lea.vmem [#allocation4], %s758
          %761 = dma.done %s756, 64
        $region60: #{nef_mlp_pallas.1} parent=51 // pred_fallthru
          _
      $region52: #{nef_mlp_pallas.1} parent=5 // pred_fallthru
        _
    $region6: #{nef_mlp_pallas.1} parent=1 // loop_footer
      %s23 = sadd.s32 1, %s19
    $region7: #{nef_mlp_pallas.1} parent=1 // loop_footer_branch
      %18 = sbr.rel target = $region3
    $region8: #{nef_mlp_pallas.1} parent=1 // loop_exit
      _
    %762 = vsyncpa [#allocation3], 1
    %s763 = scalar_lea.sflag [#allocation3], 1
    %764 = vsyncpa %s763, 1
    %765 = vsyncpa [#allocation5], 1
    %s766 = scalar_lea.sflag [#allocation5], 1
    %767 = vsyncpa %s766, 1

</llo_original>
